<compile_context>
chip_gen: v6e
topology: v6e:2x2x1
jax: 0.10.0
libtpu: 0.0.40
codegen_flags: <defaults>
</compile_context>

<pallas_src>
import jax
import jax.numpy as jnp
from jax.experimental import pallas as pl
from jax.experimental.pallas import tpu as pltpu


def _round_up(n, m):
    return ((n + m - 1) // m) * m


def policy_kernel(x_ref, w1_ref, b1_ref, w2_ref, b2_ref, w3_ref, b3_ref, out_ref):
    # affine1 + relu  (matmul in weight dtype, f32 accumulation, f32 elementwise)
    h = jnp.dot(x_ref[...], w1_ref[...], preferred_element_type=jnp.float32)
    h = jnp.maximum(h + b1_ref[...], 0.0)
    # affine2 + relu
    h = jnp.dot(h.astype(w2_ref.dtype), w2_ref[...], preferred_element_type=jnp.float32)
    h = jnp.maximum(h + b2_ref[...], 0.0)
    # affine3 (action scores; output dim is lane-padded to a multiple of 128)
    s = jnp.dot(h.astype(w3_ref.dtype), w3_ref[...], preferred_element_type=jnp.float32)
    out_ref[...] = s + b3_ref[...]


def policy_forward(x, params, *, block_b=256, use_bf16=True):
    """x: [B, input_size] float32 -> action_scores: [B, output_size] float32."""
    w1, b1, w2, b2, w3, b3 = params
    B, in_size = x.shape
    out_size = w3.shape[1]

    # --- lane-dense output: pad the action-score dim to a multiple of 128 -----------
    out_pad = _round_up(out_size, 128)
    if out_pad != out_size:
        w3 = jnp.pad(w3, ((0, 0), (0, out_pad - out_size)))
        b3 = jnp.pad(b3, ((0, 0), (0, out_pad - out_size)))

    # --- batch tiling: one grid axis over B; weights stay resident across steps -----
    TB = min(block_b, _round_up(B, 8))          # sublane-aligned batch tile
    B_pad = _round_up(B, TB)
    if B_pad != B:
        x = jnp.pad(x, ((0, B_pad - B), (0, 0)))

    # --- MXU operands in bf16 (f32 accumulation); biases/elementwise stay f32 -------
    mm_dtype = jnp.bfloat16 if use_bf16 else x.dtype
    x = x.astype(mm_dtype)
    w1, w2, w3 = (w.astype(mm_dtype) for w in (w1, w2, w3))

    grid = (B_pad // TB,)

    def const_spec(a):
        # full-array block, same block every grid step -> DMA'd once, VMEM-resident
        return pl.BlockSpec(a.shape, lambda i: (0,) * a.ndim)

    out = pl.pallas_call(
        policy_kernel,
        out_shape=jax.ShapeDtypeStruct((B_pad, out_pad), jnp.float32),
        grid=grid,
        in_specs=[
            pl.BlockSpec((TB, in_size), lambda i: (i, 0)),
            const_spec(w1), const_spec(b1),
            const_spec(w2), const_spec(b2),
            const_spec(w3), const_spec(b3),
        ],
        out_specs=pl.BlockSpec((TB, out_pad), lambda i: (i, 0)),
        compiler_params=pltpu.CompilerParams(dimension_semantics=("parallel",)),
    )(x, w1, b1, w2, b2, w3, b3)

    return out[:B, :out_size]


def init_policy_params(key, input_size, hidden_size, output_size):
    """Deterministic init mimicking nn.Linear's uniform(-1/sqrt(fan_in), 1/sqrt(fan_in)).

    Weights are stored as [in_features, out_features]."""
    ks = jax.random.split(key, 6)

    def lin(kw, kb, fan_in, fan_out):
        bound = 1.0 / jnp.sqrt(jnp.float32(fan_in))
        w = jax.random.uniform(kw, (fan_in, fan_out), jnp.float32, -bound, bound)
        b = jax.random.uniform(kb, (1, fan_out), jnp.float32, -bound, bound)
        return w, b

    w1, b1 = lin(ks[0], ks[1], input_size, hidden_size)
    w2, b2 = lin(ks[2], ks[3], hidden_size, hidden_size)
    w3, b3 = lin(ks[4], ks[5], hidden_size, output_size)
    return (w1, b1, w2, b2, w3, b3)


def _ref_forward(x, params):
    w1, b1, w2, b2, w3, b3 = params
    h = jnp.maximum(x @ w1 + b1, 0.0)
    h = jnp.maximum(h @ w2 + b2, 0.0)
    return h @ w3 + b3


if __name__ == "__main__":
    # Small shapes consistent with a REINFORCE policy MLP (e.g. CartPole-like sizes).
    batch, input_size, hidden_size, output_size = 2, 4, 32, 8

    key = jax.random.PRNGKey(0)
    k_x, k_p, k_x2 = jax.random.split(key, 3)
    x = jax.random.normal(k_x, (batch, input_size), jnp.float32)
    params = init_policy_params(k_p, input_size, hidden_size, output_size)

    # bf16-MXU path (default): f32 accumulation, compare with relaxed tolerance.
    scores = policy_forward(x, params)
    jax.block_until_ready(scores)
    ref = _ref_forward(x, params)
    assert scores.shape == (batch, output_size)
    assert jnp.allclose(scores, ref, atol=5e-2, rtol=5e-2)

    # f32 path: exact structural check against the plain-JAX reference.
    scores_f32 = policy_forward(x, params, use_bf16=False)
    jax.block_until_ready(scores_f32)
    assert jnp.allclose(scores_f32, ref, atol=1e-5, rtol=1e-5)

    # Multi-tile batch (exercises grid > 1 with resident weights + row padding).
    xb = jax.random.normal(k_x2, (260, input_size), jnp.float32)
    scores_b = policy_forward(xb, params, use_bf16=False)
    jax.block_until_ready(scores_b)
    assert scores_b.shape == (260, output_size)
    assert jnp.allclose(scores_b, _ref_forward(xb, params), atol=1e-5, rtol=1e-5)

    # TODO(synk): select_action's softmax/Categorical sampling is host-side control
    # logic (not part of Policy.forward) and is intentionally not fused into the kernel.
    print("KERNEL_OK")
</pallas_src>

<mosaic_0001>
module attributes {stable_mosaic.version = 11 : i64} {
  func.func @policy_kernel(%arg0: i32, %arg1: memref<8x4xbf16, #tpu.memory_space<vmem>>, %arg2: memref<4x32xbf16, #tpu.memory_space<vmem>>, %arg3: memref<1x32xf32, #tpu.memory_space<vmem>>, %arg4: memref<32x32xbf16, #tpu.memory_space<vmem>>, %arg5: memref<1x32xf32, #tpu.memory_space<vmem>>, %arg6: memref<32x128xbf16, #tpu.memory_space<vmem>>, %arg7: memref<1x128xf32, #tpu.memory_space<vmem>>, %arg8: memref<8x128xf32, #tpu.memory_space<vmem>>) attributes {dimension_semantics = [#tpu.dimension_semantics<parallel>], iteration_bounds = array<i64: 1>, scalar_prefetch = 0 : i64, scratch_operands = 0 : i64, tpu.core_type = #tpu.core_type<tc>, window_params = [{transform_indices = @transform_0, window_bounds = array<i64: 8, 4>}, {pipeline_mode = #tpu.pipeline_mode<synchronous>, transform_indices = @transform_1, window_bounds = array<i64: 4, 32>}, {pipeline_mode = #tpu.pipeline_mode<synchronous>, transform_indices = @transform_2, window_bounds = array<i64: 1, 32>}, {pipeline_mode = #tpu.pipeline_mode<synchronous>, transform_indices = @transform_3, window_bounds = array<i64: 32, 32>}, {pipeline_mode = #tpu.pipeline_mode<synchronous>, transform_indices = @transform_4, window_bounds = array<i64: 1, 32>}, {pipeline_mode = #tpu.pipeline_mode<synchronous>, transform_indices = @transform_5, window_bounds = array<i64: 32, 128>}, {pipeline_mode = #tpu.pipeline_mode<synchronous>, transform_indices = @transform_6, window_bounds = array<i64: 1, 128>}, {transform_indices = @transform_7, window_bounds = array<i64: 8, 128>}]} {
    %c0 = arith.constant 0 : index
    %c0_0 = arith.constant 0 : index
    %0 = vector.load %arg1[%c0, %c0_0] : memref<8x4xbf16, #tpu.memory_space<vmem>>, vector<8x4xbf16>
    %c0_1 = arith.constant 0 : index
    %c0_2 = arith.constant 0 : index
    %1 = vector.load %arg2[%c0_1, %c0_2] : memref<4x32xbf16, #tpu.memory_space<vmem>>, vector<4x32xbf16>
    %cst = arith.constant dense<0.000000e+00> : vector<8x32xf32>
    %2 = tpu.matmul %0, %1, %cst {dimension_numbers = #tpu.dot_dimension_numbers<[1], [0], [0], [1], [0, 0, 1, 1], [], []>} : vector<8x4xbf16>, vector<4x32xbf16>, vector<8x32xf32> -> vector<8x32xf32>
    %c0_3 = arith.constant 0 : index
    %c0_4 = arith.constant 0 : index
    %3 = vector.load %arg3[%c0_3, %c0_4] : memref<1x32xf32, #tpu.memory_space<vmem>>, vector<1x32xf32>
    %4 = vector.broadcast %3 : vector<1x32xf32> to vector<8x32xf32>
    %5 = arith.addf %2, %4 : vector<8x32xf32>
    %cst_5 = arith.constant 0.000000e+00 : f32
    %6 = vector.broadcast %cst_5 : f32 to vector<8x32xf32>
    %7 = arith.maximumf %5, %6 : vector<8x32xf32>
    %8 = arith.truncf %7 : vector<8x32xf32> to vector<8x32xbf16>
    %c0_6 = arith.constant 0 : index
    %c0_7 = arith.constant 0 : index
    %9 = vector.load %arg4[%c0_6, %c0_7] : memref<32x32xbf16, #tpu.memory_space<vmem>>, vector<32x32xbf16>
    %cst_8 = arith.constant dense<0.000000e+00> : vector<8x32xf32>
    %10 = tpu.matmul %8, %9, %cst_8 {dimension_numbers = #tpu.dot_dimension_numbers<[1], [0], [0], [1], [0, 0, 1, 1], [], []>} : vector<8x32xbf16>, vector<32x32xbf16>, vector<8x32xf32> -> vector<8x32xf32>
    %c0_9 = arith.constant 0 : index
    %c0_10 = arith.constant 0 : index
    %11 = vector.load %arg5[%c0_9, %c0_10] : memref<1x32xf32, #tpu.memory_space<vmem>>, vector<1x32xf32>
    %12 = vector.broadcast %11 : vector<1x32xf32> to vector<8x32xf32>
    %13 = arith.addf %10, %12 : vector<8x32xf32>
    %cst_11 = arith.constant 0.000000e+00 : f32
    %14 = vector.broadcast %cst_11 : f32 to vector<8x32xf32>
    %15 = arith.maximumf %13, %14 : vector<8x32xf32>
    %16 = arith.truncf %15 : vector<8x32xf32> to vector<8x32xbf16>
    %c0_12 = arith.constant 0 : index
    %c0_13 = arith.constant 0 : index
    %17 = vector.load %arg6[%c0_12, %c0_13] : memref<32x128xbf16, #tpu.memory_space<vmem>>, vector<32x128xbf16>
    %cst_14 = arith.constant dense<0.000000e+00> : vector<8x128xf32>
    %18 = tpu.matmul %16, %17, %cst_14 {dimension_numbers = #tpu.dot_dimension_numbers<[1], [0], [0], [1], [0, 0, 1, 1], [], []>} : vector<8x32xbf16>, vector<32x128xbf16>, vector<8x128xf32> -> vector<8x128xf32>
    %c0_15 = arith.constant 0 : index
    %c0_16 = arith.constant 0 : index
    %19 = vector.load %arg7[%c0_15, %c0_16] : memref<1x128xf32, #tpu.memory_space<vmem>>, vector<1x128xf32>
    %20 = vector.broadcast %19 : vector<1x128xf32> to vector<8x128xf32>
    %21 = arith.addf %18, %20 : vector<8x128xf32>
    %c0_17 = arith.constant 0 : index
    %c0_18 = arith.constant 0 : index
    %22 = vector.load %arg8[%c0_17, %c0_18] : memref<8x128xf32, #tpu.memory_space<vmem>>, vector<8x128xf32>
    tpu.vector_store %arg8[%c0_17, %c0_18], %21 {strides = array<i32>} : memref<8x128xf32, #tpu.memory_space<vmem>>, vector<8x128xf32>,
    return
  }
  func.func @transform_0(%arg0: i32) -> (i32, i32) {
    %c0_i32 = arith.constant 0 : i32
    %c0_i32_0 = arith.constant 0 : i32
    return %arg0, %c0_i32 : i32, i32
  }
  func.func @transform_1(%arg0: i32) -> (i32, i32) {
    %c0_i32 = arith.constant 0 : i32
    %c0_i32_0 = arith.constant 0 : i32
    %c0_i32_1 = arith.constant 0 : i32
    return %c0_i32, %c0_i32_0 : i32, i32
  }
  func.func @transform_2(%arg0: i32) -> (i32, i32) {
    %c0_i32 = arith.constant 0 : i32
    %c0_i32_0 = arith.constant 0 : i32
    %c0_i32_1 = arith.constant 0 : i32
    return %c0_i32, %c0_i32_0 : i32, i32
  }
  func.func @transform_3(%arg0: i32) -> (i32, i32) {
    %c0_i32 = arith.constant 0 : i32
    %c0_i32_0 = arith.constant 0 : i32
    %c0_i32_1 = arith.constant 0 : i32
    return %c0_i32, %c0_i32_0 : i32, i32
  }
  func.func @transform_4(%arg0: i32) -> (i32, i32) {
    %c0_i32 = arith.constant 0 : i32
    %c0_i32_0 = arith.constant 0 : i32
    %c0_i32_1 = arith.constant 0 : i32
    return %c0_i32, %c0_i32_0 : i32, i32
  }
  func.func @transform_5(%arg0: i32) -> (i32, i32) {
    %c0_i32 = arith.constant 0 : i32
    %c0_i32_0 = arith.constant 0 : i32
    %c0_i32_1 = arith.constant 0 : i32
    return %c0_i32, %c0_i32_0 : i32, i32
  }
  func.func @transform_6(%arg0: i32) -> (i32, i32) {
    %c0_i32 = arith.constant 0 : i32
    %c0_i32_0 = arith.constant 0 : i32
    %c0_i32_1 = arith.constant 0 : i32
    return %c0_i32, %c0_i32_0 : i32, i32
  }
  func.func @transform_7(%arg0: i32) -> (i32, i32) {
    %c0_i32 = arith.constant 0 : i32
    %c0_i32_0 = arith.constant 0 : i32
    return %arg0, %c0_i32 : i32, i32
  }
}

</mosaic_0001>

<llo_original>
// kernel: tpu_custom_call.1
$region0: #{tpu_custom_call.1}
  #allocation0 [shape = 'u32[]', space=smem, size = 0x4, offset = 0x4, fixed_abs, tag = 'smem constant byte address 0x4 - core index']
  #allocation1 [shape = 'u32[144,128]{1,0:T(1,128)}', space=vmem, size = 0x12000, scoped, tag = 'internal scratch']
  %s0 = inlined_call_operand.vmem [shape: bf16[8,4], index: 0, kind: input, shape index: {}]
  %s1 = inlined_call_operand.vmem [shape: bf16[4,32], index: 1, kind: input, shape index: {}]
  %s2 = inlined_call_operand.vmem [shape: f32[1,32], index: 2, kind: input, shape index: {}]
  %s3 = inlined_call_operand.hbm [shape: bf16[32,32], index: 3, kind: input, shape index: {}]
  %s4 = inlined_call_operand.vmem [shape: f32[1,32], index: 4, kind: input, shape index: {}]
  %s5 = inlined_call_operand.hbm [shape: bf16[32,128], index: 5, kind: input, shape index: {}]
  %s6 = inlined_call_operand.vmem [shape: f32[1,128], index: 6, kind: input, shape index: {}]
  %s7 = inlined_call_operand.hbm [shape: f32[8,128], index: 7, kind: output, shape index: {}]
  %s8 = sld [smem:[#allocation0]]
  $region46: #{tpu_custom_call.1} parent=0
    _
  %s10 = ssub.s32 1, %s8
  %s11 = scalar_select 0, %s10, %s8
  $region1: #{tpu_custom_call.1} parent=0
    #allocation2 [shape = 'u8[8192]{0}', space=vmem, size = 0x2000, scoped, tag = 'input window, operand 3, single buffered']
    #allocation3 [shape = 's32[1]{0}', space=sflag, size = 0x4, scoped, tag = 'scoped memory for tpu_custom_call.1']
    #allocation4 [shape = 's32[1]{0}', space=sflag, size = 0x4, scoped, tag = 'scoped memory for tpu_custom_call.1']
    #allocation5 [shape = 'u8[8192]{0}', space=vmem, size = 0x2000, scoped, tag = 'input window, operand 5, single buffered']
    #allocation6 [shape = 's32[1]{0}', space=sflag, size = 0x4, scoped, tag = 'scoped memory for tpu_custom_call.1']
    #allocation7 [shape = 'u8[4096]{0}', space=vmem, size = 0x1000, scoped, tag = 'output window, operand 0, single buffered']
    %12 = vsyncpa [#allocation3], 0
    %13 = vsyncpa [#allocation6], 0
    %14 = vsyncpa [#allocation4], 0
    // Predicated region
    $region2: #{tpu_custom_call.1} parent=1 // pred_check
      _
    $region3: #{tpu_custom_call.1} parent=1 // pred_check_branch
      %16 = sbr.rel (0) target = $region5
    $region4: #{tpu_custom_call.1} parent=1 // pred_region
      _
    $region5: #{tpu_custom_call.1} parent=1 // pred_fallthru
      _
    // Predicated region
    $region6: #{tpu_custom_call.1} parent=1 // pred_check
      _
    $region7: #{tpu_custom_call.1} parent=1 // pred_check_branch
      %18 = sbr.rel (0) target = $region9
    $region8: #{tpu_custom_call.1} parent=1 // pred_region
      _
    $region9: #{tpu_custom_call.1} parent=1 // pred_fallthru
      _
    // Predicated region
    $region10: #{tpu_custom_call.1} parent=1 // pred_check
      _
    $region11: #{tpu_custom_call.1} parent=1 // pred_check_branch
      %20 = sbr.rel (0) target = $region13
    $region12: #{tpu_custom_call.1} parent=1 // pred_region
      _
    $region13: #{tpu_custom_call.1} parent=1 // pred_fallthru
      _
    // Predicated region
    $region14: #{tpu_custom_call.1} parent=1 // pred_check
      _
    $region15: #{tpu_custom_call.1} parent=1 // pred_check_branch
      %22 = sbr.rel (0) target = $region17
    $region16: #{tpu_custom_call.1} parent=1 // pred_region
      %s24 = ssub.s32 256, 256
      %25 = vsyncadd [#allocation3], %s24
      %s26 = sshll.u32 [#allocation2], 4
      %s27 = int_to_ptr.vmem [resolvable:$true] %s26
      %32 = dma.hbm_to_vmem [thread:$0]  %s3, 256, %s27, [#allocation3], 64, 64, 4
    $region17: #{tpu_custom_call.1} parent=1 // pred_fallthru
      _
    // Predicated region
    $region18: #{tpu_custom_call.1} parent=1 // pred_check
      _
    $region19: #{tpu_custom_call.1} parent=1 // pred_check_branch
      %34 = sbr.rel (0) target = $region21
    $region20: #{tpu_custom_call.1} parent=1 // pred_region
      _
    $region21: #{tpu_custom_call.1} parent=1 // pred_fallthru
      _
    // Predicated region
    $region22: #{tpu_custom_call.1} parent=1 // pred_check
      _
    $region23: #{tpu_custom_call.1} parent=1 // pred_check_branch
      %36 = sbr.rel (0) target = $region25
    $region24: #{tpu_custom_call.1} parent=1 // pred_region
      %s38 = ssub.s32 256, 256
      %39 = vsyncadd [#allocation6], %s38
      %s40 = sshll.u32 [#allocation5], 4
      %s41 = int_to_ptr.vmem [resolvable:$true] %s40
      %46 = dma.hbm_to_vmem [thread:$0]  %s5, 256, %s41, [#allocation6], 64, 64, 4
    $region25: #{tpu_custom_call.1} parent=1 // pred_fallthru
      _
    // Predicated region
    $region26: #{tpu_custom_call.1} parent=1 // pred_check
      _
    $region27: #{tpu_custom_call.1} parent=1 // pred_check_branch
      %48 = sbr.rel (0) target = $region29
    $region28: #{tpu_custom_call.1} parent=1 // pred_region
      _
    $region29: #{tpu_custom_call.1} parent=1 // pred_fallthru
      _
    // Predicated region
    $region30: #{tpu_custom_call.1} parent=1 // pred_check
      _
    $region31: #{tpu_custom_call.1} parent=1 // pred_check_branch
      %50 = sbr.rel (0) target = $region33
    $region32: #{tpu_custom_call.1} parent=1 // pred_region
      %51 = dma.done [#allocation3], 256
    $region33: #{tpu_custom_call.1} parent=1 // pred_fallthru
      _
    // Predicated region
    $region34: #{tpu_custom_call.1} parent=1 // pred_check
      _
    $region35: #{tpu_custom_call.1} parent=1 // pred_check_branch
      %53 = sbr.rel (0) target = $region37
    $region36: #{tpu_custom_call.1} parent=1 // pred_region
      %54 = dma.done [#allocation6], 256
    $region37: #{tpu_custom_call.1} parent=1 // pred_fallthru
      _
    %v56 = vld [vmem:[%s0] sm:$0xf]
    %v57 = vld [vmem:[%s1] sm:$0x3]
    %v58 = vld [vmem:[%s2] sm:$0x1]
    %v60 = vlaneseq
    %v61 = vshrl.u32 %v60, 7
    %v62 = vsub.s32 0, %v61
    %v63 = vrot.slane %v58, %v62
    %vm65 = vcmask 31744
    %v67 = vsel %vm65, %v56, 0
    %vm69 = vcmask 1041408
    %v71 = vsel %vm69, %v57, 0
    %73 = vmatprep.subr.bf16.mxu0 0
    %74 = vmatpush1.bf16.msra.mxu0 0
    %75 = vmatprep.subr.bf16.mxu0 0
    %76 = vmatpush1.bf16.msra.mxu0 0
    %77 = vmatprep.subr.bf16.mxu0 0
    %78 = vmatpush1.bf16.msra.mxu0 0
    %79 = vmatprep.subr.bf16.mxu0 0
    %80 = vmatpush1.bf16.msra.mxu0 0
    %81 = vmatprep.subr.bf16.mxu0 0
    %82 = vmatpush1.bf16.msra.mxu0 0
    %83 = vmatprep.subr.bf16.mxu0 0
    %84 = vmatpush1.bf16.msra.mxu0 0
    %85 = vmatprep.subr.bf16.mxu0 0
    %86 = vmatpush1.bf16.msra.mxu0 0
    %87 = vmatprep.subr.bf16.mxu0 0
    %88 = vmatpush1.bf16.msra.mxu0 %v71
    %89 = vmatprep.subr.bf16.mxu0 0
    %90 = vmatpush2.bf16.msra.mxu0 0
    %91 = vmatprep.subr.bf16.mxu0 0
    %92 = vmatpush2.bf16.msra.mxu0 0
    %93 = vmatprep.subr.bf16.mxu0 0
    %94 = vmatpush2.bf16.msra.mxu0 0
    %95 = vmatprep.subr.bf16.mxu0 0
    %96 = vmatpush2.bf16.msra.mxu0 0
    %97 = vmatprep.subr.bf16.mxu0 0
    %98 = vmatpush2.bf16.msra.mxu0 0
    %99 = vmatprep.subr.bf16.mxu0 0
    %100 = vmatpush2.bf16.msra.mxu0 0
    %101 = vmatprep.subr.bf16.mxu0 0
    %102 = vmatpush2.bf16.msra.mxu0 0
    %103 = vmatprep.subr.bf16.mxu0 0
    %104 = vmatpush2.bf16.msra.mxu0 0
    %105 = vmatprep.mubr.bf16.mxu0 0
    %106 = vmatmul.mubr.bf16.gmra.mxu0 %v67
    %v107 = vpop.f32.mrf.mxu0
    %v108 = vadd.f32 %v63, %v107
    %v109 = vpop.f32.mrf.mxu0
    %v110 = vpop.f32.mrf.mxu0
    %v111 = vpop.f32.mrf.mxu0
    %112 = vdwg.mxu0
    %v113 = vmax.f32 %v108, 0.0
    %v114 = vpack.c.bf16 %v113, %v113
    %v115 = vld [vmem:[#allocation2] sm:$0xf]
    %v116 = vld [vmem:[#allocation2 + $0x4] sm:$0xf]
    %v117 = vld [vmem:[#allocation2 + $0x8] sm:$0xf]
    %v118 = vld [vmem:[#allocation2 + $0xc] sm:$0xf]
    %v119 = vld [vmem:[%s4] sm:$0x1]
    %v121 = vlaneseq
    %v122 = vshrl.u32 %v121, 7
    %v123 = vsub.s32 0, %v122
    %v124 = vrot.slane %v119, %v123
    %v130 = vunpack.c.l.b16 %v115
    %v131 = vunpack.c.l.b16 %v116
    %v132 = vunpack.c.l.b16 %v117
    %v133 = vunpack.c.l.b16 %v118
    %v134 = vpack.c.b16 %v131, %v130
    %v135 = vpack.c.b16 %v133, %v132
    %vm138 = vcmask 261120
    %v140 = vsel %vm138, %v114, 0
    %142 = vmatprep.subr.bf16.mxu0 0
    %143 = vmatpush1.bf16.msra.mxu0 0
    %144 = vmatprep.subr.bf16.mxu0 0
    %145 = vmatpush1.bf16.msra.mxu0 0
    %146 = vmatprep.subr.bf16.mxu0 0
    %147 = vmatpush1.bf16.msra.mxu0 0
    %148 = vmatprep.subr.bf16.mxu0 0
    %149 = vmatpush1.bf16.msra.mxu0 0
    %150 = vmatprep.subr.bf16.mxu0 0
    %151 = vmatpush1.bf16.msra.mxu0 0
    %152 = vmatprep.subr.bf16.mxu0 0
    %153 = vmatpush1.bf16.msra.mxu0 0
    %154 = vmatprep.subr.bf16.mxu0 0
    %155 = vmatpush1.bf16.msra.mxu0 %v135
    %156 = vmatprep.subr.bf16.mxu0 0
    %157 = vmatpush1.bf16.msra.mxu0 %v134
    %158 = vmatprep.subr.bf16.mxu0 0
    %159 = vmatpush2.bf16.msra.mxu0 0
    %160 = vmatprep.subr.bf16.mxu0 0
    %161 = vmatpush2.bf16.msra.mxu0 0
    %162 = vmatprep.subr.bf16.mxu0 0
    %163 = vmatpush2.bf16.msra.mxu0 0
    %164 = vmatprep.subr.bf16.mxu0 0
    %165 = vmatpush2.bf16.msra.mxu0 0
    %166 = vmatprep.subr.bf16.mxu0 0
    %167 = vmatpush2.bf16.msra.mxu0 0
    %168 = vmatprep.subr.bf16.mxu0 0
    %169 = vmatpush2.bf16.msra.mxu0 0
    %170 = vmatprep.subr.bf16.mxu0 0
    %171 = vmatpush2.bf16.msra.mxu0 0
    %172 = vmatprep.subr.bf16.mxu0 0
    %173 = vmatpush2.bf16.msra.mxu0 0
    %174 = vmatprep.mubr.bf16.mxu0 0
    %175 = vmatmul.mubr.bf16.gmra.mxu0 %v140
    %v176 = vpop.f32.mrf.mxu0
    %v177 = vadd.f32 %v124, %v176
    %v178 = vpop.f32.mrf.mxu0
    %v179 = vpop.f32.mrf.mxu0
    %v180 = vpop.f32.mrf.mxu0
    %181 = vdwg.mxu0
    %v182 = vmax.f32 %v177, 0.0
    %v183 = vpack.c.bf16 %v182, %v182
    %v184 = vld [vmem:[#allocation5] sm:$0xf]
    %v185 = vld [vmem:[#allocation5 + $0x4] sm:$0xf]
    %v186 = vld [vmem:[#allocation5 + $0x8] sm:$0xf]
    %v187 = vld [vmem:[#allocation5 + $0xc] sm:$0xf]
    %v188 = vld [vmem:[%s6] sm:$0x1]
    %v190 = vlaneseq
    %v191 = vshrl.u32 %v190, 7
    %v192 = vsub.s32 0, %v191
    %v193 = vrot.slane %v188, %v192
    %v199 = vunpack.c.l.b16 %v184
    %v200 = vunpack.c.l.b16 %v185
    %v201 = vunpack.c.l.b16 %v186
    %v202 = vunpack.c.l.b16 %v187
    %v203 = vpack.c.b16 %v200, %v199
    %v204 = vpack.c.b16 %v202, %v201
    %v208 = vsel %vm138, %v183, 0
    %210 = vmatprep.subr.bf16.mxu0 0
    %211 = vmatpush1.bf16.msra.mxu0 0
    %212 = vmatprep.subr.bf16.mxu0 0
    %213 = vmatpush1.bf16.msra.mxu0 0
    %214 = vmatprep.subr.bf16.mxu0 0
    %215 = vmatpush1.bf16.msra.mxu0 0
    %216 = vmatprep.subr.bf16.mxu0 0
    %217 = vmatpush1.bf16.msra.mxu0 0
    %218 = vmatprep.subr.bf16.mxu0 0
    %219 = vmatpush1.bf16.msra.mxu0 0
    %220 = vmatprep.subr.bf16.mxu0 0
    %221 = vmatpush1.bf16.msra.mxu0 0
    %222 = vmatprep.subr.bf16.mxu0 0
    %223 = vmatpush1.bf16.msra.mxu0 %v204
    %224 = vmatprep.subr.bf16.mxu0 0
    %225 = vmatpush1.bf16.msra.mxu0 %v203
    %226 = vmatprep.subr.bf16.mxu0 0
    %227 = vmatpush2.bf16.msra.mxu0 0
    %228 = vmatprep.subr.bf16.mxu0 0
    %229 = vmatpush2.bf16.msra.mxu0 0
    %230 = vmatprep.subr.bf16.mxu0 0
    %231 = vmatpush2.bf16.msra.mxu0 0
    %232 = vmatprep.subr.bf16.mxu0 0
    %233 = vmatpush2.bf16.msra.mxu0 0
    %234 = vmatprep.subr.bf16.mxu0 0
    %235 = vmatpush2.bf16.msra.mxu0 0
    %236 = vmatprep.subr.bf16.mxu0 0
    %237 = vmatpush2.bf16.msra.mxu0 0
    %238 = vmatprep.subr.bf16.mxu0 0
    %239 = vmatpush2.bf16.msra.mxu0 0
    %240 = vmatprep.subr.bf16.mxu0 0
    %241 = vmatpush2.bf16.msra.mxu0 0
    %242 = vmatprep.mubr.bf16.mxu0 0
    %243 = vmatmul.mubr.bf16.gmra.mxu0 %v208
    %v244 = vpop.f32.mrf.mxu0
    %v245 = vadd.f32 %v193, %v244
    %v246 = vpop.f32.mrf.mxu0
    %v247 = vpop.f32.mrf.mxu0
    %v248 = vpop.f32.mrf.mxu0
    %249 = vdwg.mxu0
    %250 = vst [vmem:[#allocation7] sm:$0xff] %v245
    // Predicated region
    $region38: #{tpu_custom_call.1} parent=1 // pred_check
      _
    $region39: #{tpu_custom_call.1} parent=1 // pred_check_branch
      %252 = sbr.rel (0) target = $region41
    $region40: #{tpu_custom_call.1} parent=1 // pred_region
      %s254 = ssub.s32 128, 128
      %255 = vsyncadd [#allocation4], %s254
      %s257 = sshll.u32 [#allocation7], 4
      %s258 = int_to_ptr.vmem [resolvable:$true] %s257
      %260 = dma.vmem_to_hbm [thread:$0]  %s258, 128, %s7, [#allocation4]
    $region41: #{tpu_custom_call.1} parent=1 // pred_fallthru
      _
    // Predicated region
    $region42: #{tpu_custom_call.1} parent=1 // pred_check
      _
    $region43: #{tpu_custom_call.1} parent=1 // pred_check_branch
      %262 = sbr.rel (0) target = $region45
    $region44: #{tpu_custom_call.1} parent=1 // pred_region
      %263 = dma.done [#allocation4], 128
    $region45: #{tpu_custom_call.1} parent=1 // pred_fallthru
      _
    %264 = vsyncpa [#allocation3], 1
    %265 = vsyncpa [#allocation6], 1
    %266 = vsyncpa [#allocation4], 1

</llo_original>
